<compile_context>
chip_gen: v6e
topology: v6e:2x2x1
jax: 0.10.0
libtpu: 0.0.40
codegen_flags: <defaults>
</compile_context>

<pallas_src>
import functools

import jax
import jax.numpy as jnp
from jax.experimental import pallas as pl
from jax.experimental.pallas import tpu as pltpu

dim_input = 5
dim_hidden = 6
dim_output = 2

# Flat parameter layout (f32[PARAM_LEN], lives in SMEM inside the kernel):
W1_OFF = 0                                   # w1[k, j] at W1_OFF + k*dim_hidden + j
B1_OFF = W1_OFF + dim_input * dim_hidden     # 30
W2_OFF = B1_OFF + dim_hidden                 # 36: w2[j, m] at W2_OFF + j*dim_output + m
B2_OFF = W2_OFF + dim_hidden * dim_output    # 48
PARAM_LEN = B2_OFF + dim_output              # 50

LANE_GRAN = 128   # lane granularity of batch tiles
SUBLANES = 8      # batch positions stacked along the sublane axis


def _cdiv(a, b):
    return (a + b - 1) // b


def _round_up(a, b):
    return _cdiv(a, b) * b


def controller_kernel(w_ref, x_ref, o_ref):
    """w_ref: f32[PARAM_LEN] in SMEM (all weights/biases as scalars).
    x_ref: f32[dim_input, 8, TL]  (feature, batch-sublane, batch-lane), VMEM.
    o_ref: f32[dim_output, 8, TL] (action,  batch-sublane, batch-lane), VMEM."""
    tl = x_ref.shape[-1]
    # Lane-chunk size: largest of 512/256/128 that divides the tile. Keeps the
    # live register set small while the grid-step DMA block stays large.
    ch = max(c for c in (512, 256, 128) if tl % c == 0)

    # Splat every scalar weight to a dense (8, ch) tile ONCE per grid step,
    # hoisted out of the chunk loop (JAX does not CSE broadcast_in_dim).
    def splat(i):
        return jnp.full((SUBLANES, ch), w_ref[i], dtype=jnp.float32)

    w1v = [[splat(W1_OFF + k * dim_hidden + j) for j in range(dim_hidden)]
           for k in range(dim_input)]
    b1v = [splat(B1_OFF + j) for j in range(dim_hidden)]
    w2v = [[splat(W2_OFF + j * dim_output + m) for m in range(dim_output)]
           for j in range(dim_hidden)]
    b2v = [splat(B2_OFF + m) for m in range(dim_output)]

    for c0 in range(0, tl, ch):                               # static unroll
        sl = slice(c0, c0 + ch)                               # 128-aligned lane slice
        xs = [x_ref[k, :, sl] for k in range(dim_input)]      # dense (8, ch) tiles

        # Layer 1 + sigmoid (tanh identity: one EUP op, no divide, no overflow).
        hs = []
        for j in range(dim_hidden):
            acc = b1v[j]
            for k in range(dim_input):
                acc = acc + xs[k] * w1v[k][j]
            hs.append(0.5 * jnp.tanh(0.5 * acc) + 0.5)

        # Layer 2 + tanh; dense unmasked (8, ch) stores, dim_output rows only.
        for m in range(dim_output):
            acc = b2v[m]
            for j in range(dim_hidden):
                acc = acc + hs[j] * w2v[j][m]
            o_ref[m, :, sl] = jnp.tanh(acc)


def pack_params(w1, b1, w2, b2):
    """Pack (w1:(5,6), b1:(6,), w2:(6,2), b2:(2,)) into one flat f32[50] array."""
    return jnp.concatenate([
        w1.reshape(-1).astype(jnp.float32),
        b1.reshape(-1).astype(jnp.float32),
        w2.reshape(-1).astype(jnp.float32),
        b2.reshape(-1).astype(jnp.float32),
    ])


@functools.partial(jax.jit, static_argnames=("lane_block",))
def controller_forward(x, params, *, lane_block=8192):
    """x: (B, dim_input) f32; params: flat f32[50] from pack_params().
    Returns (B, dim_output) f32."""
    B, K = x.shape
    assert K == dim_input
    assert params.shape == (PARAM_LEN,)

    # Lanes needed so 8 sublane-rows x L lanes cover B batch elements.
    l_needed = _round_up(max(_cdiv(B, SUBLANES), 1), LANE_GRAN)

    # Balanced tiles; guarantee >= 2 grid steps for non-trivial batches so v7x
    # can shard the grid across both TensorCores (no-op on v5e/v6e).
    if B >= 4096 and l_needed >= 2 * LANE_GRAN:
        n_steps = max(2, _cdiv(l_needed, lane_block))
    else:
        n_steps = _cdiv(l_needed, lane_block)
    tl = _round_up(_cdiv(l_needed, n_steps), LANE_GRAN)
    L = n_steps * tl
    b_pad = SUBLANES * L

    # Lay batch out as (feature, sublane, lane); the tail padding is fused by
    # XLA into this (required) relayout copy — no separate full pad pass.
    x_prep = jnp.pad(x.astype(jnp.float32), ((0, b_pad - B), (0, 0)))
    x_prep = x_prep.T.reshape(dim_input, SUBLANES, L)

    out_prep = pl.pallas_call(
        controller_kernel,
        out_shape=jax.ShapeDtypeStruct((dim_output, SUBLANES, L), jnp.float32),
        grid=(n_steps,),
        in_specs=[
            # 50 scalar weights -> SMEM, whole array, resident across the grid.
            pl.BlockSpec(memory_space=pltpu.MemorySpace.SMEM),
            # x: blocked along the batch-lane axis.
            pl.BlockSpec((dim_input, SUBLANES, tl), lambda i: (0, 0, i)),
        ],
        # Output carries only dim_output rows -> 8 B of HBM writeback per element.
        out_specs=pl.BlockSpec((dim_output, SUBLANES, tl), lambda i: (0, 0, i)),
        compiler_params=pltpu.CompilerParams(
            dimension_semantics=("parallel",),
            # Blocks are ~3.5 MiB double-buffered at the default tile size, so no
            # vmem_limit_bytes override is needed even on v5e (16 MiB scoped).
        ),
    )(params, x_prep)

    # (dim_output, 8, L) -> (B, dim_output)
    return out_prep.reshape(dim_output, b_pad).T[:B]


def init_params(key):
    """nn.Linear-style uniform(-1/sqrt(fan_in), 1/sqrt(fan_in)) init."""
    k1, k2, k3, k4 = jax.random.split(key, 4)
    bound1 = 1.0 / jnp.sqrt(jnp.float32(dim_input))
    bound2 = 1.0 / jnp.sqrt(jnp.float32(dim_hidden))
    w1 = jax.random.uniform(k1, (dim_input, dim_hidden), jnp.float32, -bound1, bound1)
    b1 = jax.random.uniform(k2, (dim_hidden,), jnp.float32, -bound1, bound1)
    w2 = jax.random.uniform(k3, (dim_hidden, dim_output), jnp.float32, -bound2, bound2)
    b2 = jax.random.uniform(k4, (dim_output,), jnp.float32, -bound2, bound2)
    return w1, b1, w2, b2


def _reference(x, w1, b1, w2, b2):
    return jnp.tanh(jax.nn.sigmoid(x @ w1 + b1) @ w2 + b2)


if __name__ == "__main__":
    key = jax.random.PRNGKey(0)
    k_params, k_x, k_x2 = jax.random.split(key, 3)
    w1, b1, w2, b2 = init_params(k_params)
    params = pack_params(w1, b1, w2, b2)

    # Small batch (typical controller call).
    batch = 8
    x = jax.random.normal(k_x, (batch, dim_input), jnp.float32)
    out = jax.block_until_ready(controller_forward(x, params))
    ref = _reference(x, w1, b1, w2, b2)
    assert out.shape == (batch, dim_output)
    assert jnp.allclose(out, ref, atol=1e-5, rtol=1e-5)

    # Ragged batch (exercises tail padding + relayout/unlayout path).
    batch2 = 37
    x2 = jax.random.normal(k_x2, (batch2, dim_input), jnp.float32)
    out2 = jax.block_until_ready(controller_forward(x2, params))
    ref2 = _reference(x2, w1, b1, w2, b2)
    assert out2.shape == (batch2, dim_output)
    assert jnp.allclose(out2, ref2, atol=1e-5, rtol=1e-5)

    print("KERNEL_OK")
</pallas_src>

<mosaic_0001>
module attributes {stable_mosaic.version = 11 : i64} {
  func.func @controller_kernel(%arg0: i32, %arg1: memref<50xf32, #tpu.memory_space<smem>>, %arg2: memref<5x8x128xf32, #tpu.memory_space<vmem>>, %arg3: memref<2x8x128xf32, #tpu.memory_space<vmem>>) attributes {dimension_semantics = [#tpu.dimension_semantics<parallel>], iteration_bounds = array<i64: 1>, scalar_prefetch = 0 : i64, scratch_operands = 0 : i64, tpu.core_type = #tpu.core_type<tc>, window_params = [{transform_indices = @transform_0, window_bounds = array<i64: 50>}, {transform_indices = @transform_1, window_bounds = array<i64: 5, 8, 128>}, {transform_indices = @transform_2, window_bounds = array<i64: 2, 8, 128>}]} {
    %c0 = arith.constant 0 : index
    %0 = memref.load %arg1[%c0] : memref<50xf32, #tpu.memory_space<smem>>
    %1 = vector.broadcast %0 : f32 to vector<8x128xf32>
    %c1 = arith.constant 1 : index
    %2 = memref.load %arg1[%c1] : memref<50xf32, #tpu.memory_space<smem>>
    %3 = vector.broadcast %2 : f32 to vector<8x128xf32>
    %c2 = arith.constant 2 : index
    %4 = memref.load %arg1[%c2] : memref<50xf32, #tpu.memory_space<smem>>
    %5 = vector.broadcast %4 : f32 to vector<8x128xf32>
    %c3 = arith.constant 3 : index
    %6 = memref.load %arg1[%c3] : memref<50xf32, #tpu.memory_space<smem>>
    %7 = vector.broadcast %6 : f32 to vector<8x128xf32>
    %c4 = arith.constant 4 : index
    %8 = memref.load %arg1[%c4] : memref<50xf32, #tpu.memory_space<smem>>
    %9 = vector.broadcast %8 : f32 to vector<8x128xf32>
    %c5 = arith.constant 5 : index
    %10 = memref.load %arg1[%c5] : memref<50xf32, #tpu.memory_space<smem>>
    %11 = vector.broadcast %10 : f32 to vector<8x128xf32>
    %c6 = arith.constant 6 : index
    %12 = memref.load %arg1[%c6] : memref<50xf32, #tpu.memory_space<smem>>
    %13 = vector.broadcast %12 : f32 to vector<8x128xf32>
    %c7 = arith.constant 7 : index
    %14 = memref.load %arg1[%c7] : memref<50xf32, #tpu.memory_space<smem>>
    %15 = vector.broadcast %14 : f32 to vector<8x128xf32>
    %c8 = arith.constant 8 : index
    %16 = memref.load %arg1[%c8] : memref<50xf32, #tpu.memory_space<smem>>
    %17 = vector.broadcast %16 : f32 to vector<8x128xf32>
    %c9 = arith.constant 9 : index
    %18 = memref.load %arg1[%c9] : memref<50xf32, #tpu.memory_space<smem>>
    %19 = vector.broadcast %18 : f32 to vector<8x128xf32>
    %c10 = arith.constant 10 : index
    %20 = memref.load %arg1[%c10] : memref<50xf32, #tpu.memory_space<smem>>
    %21 = vector.broadcast %20 : f32 to vector<8x128xf32>
    %c11 = arith.constant 11 : index
    %22 = memref.load %arg1[%c11] : memref<50xf32, #tpu.memory_space<smem>>
    %23 = vector.broadcast %22 : f32 to vector<8x128xf32>
    %c12 = arith.constant 12 : index
    %24 = memref.load %arg1[%c12] : memref<50xf32, #tpu.memory_space<smem>>
    %25 = vector.broadcast %24 : f32 to vector<8x128xf32>
    %c13 = arith.constant 13 : index
    %26 = memref.load %arg1[%c13] : memref<50xf32, #tpu.memory_space<smem>>
    %27 = vector.broadcast %26 : f32 to vector<8x128xf32>
    %c14 = arith.constant 14 : index
    %28 = memref.load %arg1[%c14] : memref<50xf32, #tpu.memory_space<smem>>
    %29 = vector.broadcast %28 : f32 to vector<8x128xf32>
    %c15 = arith.constant 15 : index
    %30 = memref.load %arg1[%c15] : memref<50xf32, #tpu.memory_space<smem>>
    %31 = vector.broadcast %30 : f32 to vector<8x128xf32>
    %c16 = arith.constant 16 : index
    %32 = memref.load %arg1[%c16] : memref<50xf32, #tpu.memory_space<smem>>
    %33 = vector.broadcast %32 : f32 to vector<8x128xf32>
    %c17 = arith.constant 17 : index
    %34 = memref.load %arg1[%c17] : memref<50xf32, #tpu.memory_space<smem>>
    %35 = vector.broadcast %34 : f32 to vector<8x128xf32>
    %c18 = arith.constant 18 : index
    %36 = memref.load %arg1[%c18] : memref<50xf32, #tpu.memory_space<smem>>
    %37 = vector.broadcast %36 : f32 to vector<8x128xf32>
    %c19 = arith.constant 19 : index
    %38 = memref.load %arg1[%c19] : memref<50xf32, #tpu.memory_space<smem>>
    %39 = vector.broadcast %38 : f32 to vector<8x128xf32>
    %c20 = arith.constant 20 : index
    %40 = memref.load %arg1[%c20] : memref<50xf32, #tpu.memory_space<smem>>
    %41 = vector.broadcast %40 : f32 to vector<8x128xf32>
    %c21 = arith.constant 21 : index
    %42 = memref.load %arg1[%c21] : memref<50xf32, #tpu.memory_space<smem>>
    %43 = vector.broadcast %42 : f32 to vector<8x128xf32>
    %c22 = arith.constant 22 : index
    %44 = memref.load %arg1[%c22] : memref<50xf32, #tpu.memory_space<smem>>
    %45 = vector.broadcast %44 : f32 to vector<8x128xf32>
    %c23 = arith.constant 23 : index
    %46 = memref.load %arg1[%c23] : memref<50xf32, #tpu.memory_space<smem>>
    %47 = vector.broadcast %46 : f32 to vector<8x128xf32>
    %c24 = arith.constant 24 : index
    %48 = memref.load %arg1[%c24] : memref<50xf32, #tpu.memory_space<smem>>
    %49 = vector.broadcast %48 : f32 to vector<8x128xf32>
    %c25 = arith.constant 25 : index
    %50 = memref.load %arg1[%c25] : memref<50xf32, #tpu.memory_space<smem>>
    %51 = vector.broadcast %50 : f32 to vector<8x128xf32>
    %c26 = arith.constant 26 : index
    %52 = memref.load %arg1[%c26] : memref<50xf32, #tpu.memory_space<smem>>
    %53 = vector.broadcast %52 : f32 to vector<8x128xf32>
    %c27 = arith.constant 27 : index
    %54 = memref.load %arg1[%c27] : memref<50xf32, #tpu.memory_space<smem>>
    %55 = vector.broadcast %54 : f32 to vector<8x128xf32>
    %c28 = arith.constant 28 : index
    %56 = memref.load %arg1[%c28] : memref<50xf32, #tpu.memory_space<smem>>
    %57 = vector.broadcast %56 : f32 to vector<8x128xf32>
    %c29 = arith.constant 29 : index
    %58 = memref.load %arg1[%c29] : memref<50xf32, #tpu.memory_space<smem>>
    %59 = vector.broadcast %58 : f32 to vector<8x128xf32>
    %c30 = arith.constant 30 : index
    %60 = memref.load %arg1[%c30] : memref<50xf32, #tpu.memory_space<smem>>
    %61 = vector.broadcast %60 : f32 to vector<8x128xf32>
    %c31 = arith.constant 31 : index
    %62 = memref.load %arg1[%c31] : memref<50xf32, #tpu.memory_space<smem>>
    %63 = vector.broadcast %62 : f32 to vector<8x128xf32>
    %c32 = arith.constant 32 : index
    %64 = memref.load %arg1[%c32] : memref<50xf32, #tpu.memory_space<smem>>
    %65 = vector.broadcast %64 : f32 to vector<8x128xf32>
    %c33 = arith.constant 33 : index
    %66 = memref.load %arg1[%c33] : memref<50xf32, #tpu.memory_space<smem>>
    %67 = vector.broadcast %66 : f32 to vector<8x128xf32>
    %c34 = arith.constant 34 : index
    %68 = memref.load %arg1[%c34] : memref<50xf32, #tpu.memory_space<smem>>
    %69 = vector.broadcast %68 : f32 to vector<8x128xf32>
    %c35 = arith.constant 35 : index
    %70 = memref.load %arg1[%c35] : memref<50xf32, #tpu.memory_space<smem>>
    %71 = vector.broadcast %70 : f32 to vector<8x128xf32>
    %c36 = arith.constant 36 : index
    %72 = memref.load %arg1[%c36] : memref<50xf32, #tpu.memory_space<smem>>
    %73 = vector.broadcast %72 : f32 to vector<8x128xf32>
    %c37 = arith.constant 37 : index
    %74 = memref.load %arg1[%c37] : memref<50xf32, #tpu.memory_space<smem>>
    %75 = vector.broadcast %74 : f32 to vector<8x128xf32>
    %c38 = arith.constant 38 : index
    %76 = memref.load %arg1[%c38] : memref<50xf32, #tpu.memory_space<smem>>
    %77 = vector.broadcast %76 : f32 to vector<8x128xf32>
    %c39 = arith.constant 39 : index
    %78 = memref.load %arg1[%c39] : memref<50xf32, #tpu.memory_space<smem>>
    %79 = vector.broadcast %78 : f32 to vector<8x128xf32>
    %c40 = arith.constant 40 : index
    %80 = memref.load %arg1[%c40] : memref<50xf32, #tpu.memory_space<smem>>
    %81 = vector.broadcast %80 : f32 to vector<8x128xf32>
    %c41 = arith.constant 41 : index
    %82 = memref.load %arg1[%c41] : memref<50xf32, #tpu.memory_space<smem>>
    %83 = vector.broadcast %82 : f32 to vector<8x128xf32>
    %c42 = arith.constant 42 : index
    %84 = memref.load %arg1[%c42] : memref<50xf32, #tpu.memory_space<smem>>
    %85 = vector.broadcast %84 : f32 to vector<8x128xf32>
    %c43 = arith.constant 43 : index
    %86 = memref.load %arg1[%c43] : memref<50xf32, #tpu.memory_space<smem>>
    %87 = vector.broadcast %86 : f32 to vector<8x128xf32>
    %c44 = arith.constant 44 : index
    %88 = memref.load %arg1[%c44] : memref<50xf32, #tpu.memory_space<smem>>
    %89 = vector.broadcast %88 : f32 to vector<8x128xf32>
    %c45 = arith.constant 45 : index
    %90 = memref.load %arg1[%c45] : memref<50xf32, #tpu.memory_space<smem>>
    %91 = vector.broadcast %90 : f32 to vector<8x128xf32>
    %c46 = arith.constant 46 : index
    %92 = memref.load %arg1[%c46] : memref<50xf32, #tpu.memory_space<smem>>
    %93 = vector.broadcast %92 : f32 to vector<8x128xf32>
    %c47 = arith.constant 47 : index
    %94 = memref.load %arg1[%c47] : memref<50xf32, #tpu.memory_space<smem>>
    %95 = vector.broadcast %94 : f32 to vector<8x128xf32>
    %c48 = arith.constant 48 : index
    %96 = memref.load %arg1[%c48] : memref<50xf32, #tpu.memory_space<smem>>
    %97 = vector.broadcast %96 : f32 to vector<8x128xf32>
    %c49 = arith.constant 49 : index
    %98 = memref.load %arg1[%c49] : memref<50xf32, #tpu.memory_space<smem>>
    %99 = vector.broadcast %98 : f32 to vector<8x128xf32>
    %c0_0 = arith.constant 0 : index
    %c0_1 = arith.constant 0 : index
    %c0_2 = arith.constant 0 : index
    %100 = vector.load %arg2[%c0_0, %c0_1, %c0_2] : memref<5x8x128xf32, #tpu.memory_space<vmem>>, vector<1x8x128xf32>
    %101 = vector.shape_cast %100 : vector<1x8x128xf32> to vector<8x128xf32>
    %c1_3 = arith.constant 1 : index
    %c0_4 = arith.constant 0 : index
    %c0_5 = arith.constant 0 : index
    %102 = vector.load %arg2[%c1_3, %c0_4, %c0_5] : memref<5x8x128xf32, #tpu.memory_space<vmem>>, vector<1x8x128xf32>
    %103 = vector.shape_cast %102 : vector<1x8x128xf32> to vector<8x128xf32>
    %c2_6 = arith.constant 2 : index
    %c0_7 = arith.constant 0 : index
    %c0_8 = arith.constant 0 : index
    %104 = vector.load %arg2[%c2_6, %c0_7, %c0_8] : memref<5x8x128xf32, #tpu.memory_space<vmem>>, vector<1x8x128xf32>
    %105 = vector.shape_cast %104 : vector<1x8x128xf32> to vector<8x128xf32>
    %c3_9 = arith.constant 3 : index
    %c0_10 = arith.constant 0 : index
    %c0_11 = arith.constant 0 : index
    %106 = vector.load %arg2[%c3_9, %c0_10, %c0_11] : memref<5x8x128xf32, #tpu.memory_space<vmem>>, vector<1x8x128xf32>
    %107 = vector.shape_cast %106 : vector<1x8x128xf32> to vector<8x128xf32>
    %c4_12 = arith.constant 4 : index
    %c0_13 = arith.constant 0 : index
    %c0_14 = arith.constant 0 : index
    %108 = vector.load %arg2[%c4_12, %c0_13, %c0_14] : memref<5x8x128xf32, #tpu.memory_space<vmem>>, vector<1x8x128xf32>
    %109 = vector.shape_cast %108 : vector<1x8x128xf32> to vector<8x128xf32>
    %110 = arith.mulf %101, %1 : vector<8x128xf32>
    %111 = arith.addf %61, %110 : vector<8x128xf32>
    %112 = arith.mulf %103, %13 : vector<8x128xf32>
    %113 = arith.addf %111, %112 : vector<8x128xf32>
    %114 = arith.mulf %105, %25 : vector<8x128xf32>
    %115 = arith.addf %113, %114 : vector<8x128xf32>
    %116 = arith.mulf %107, %37 : vector<8x128xf32>
    %117 = arith.addf %115, %116 : vector<8x128xf32>
    %118 = arith.mulf %109, %49 : vector<8x128xf32>
    %119 = arith.addf %117, %118 : vector<8x128xf32>
    %cst = arith.constant 5.000000e-01 : f32
    %120 = vector.broadcast %cst : f32 to vector<8x128xf32>
    %121 = arith.mulf %120, %119 : vector<8x128xf32>
    %122 = math.tanh %121 : vector<8x128xf32>
    %cst_15 = arith.constant 5.000000e-01 : f32
    %123 = vector.broadcast %cst_15 : f32 to vector<8x128xf32>
    %124 = arith.mulf %123, %122 : vector<8x128xf32>
    %cst_16 = arith.constant 5.000000e-01 : f32
    %125 = vector.broadcast %cst_16 : f32 to vector<8x128xf32>
    %126 = arith.addf %124, %125 : vector<8x128xf32>
    %127 = arith.mulf %101, %3 : vector<8x128xf32>
    %128 = arith.addf %63, %127 : vector<8x128xf32>
    %129 = arith.mulf %103, %15 : vector<8x128xf32>
    %130 = arith.addf %128, %129 : vector<8x128xf32>
    %131 = arith.mulf %105, %27 : vector<8x128xf32>
    %132 = arith.addf %130, %131 : vector<8x128xf32>
    %133 = arith.mulf %107, %39 : vector<8x128xf32>
    %134 = arith.addf %132, %133 : vector<8x128xf32>
    %135 = arith.mulf %109, %51 : vector<8x128xf32>
    %136 = arith.addf %134, %135 : vector<8x128xf32>
    %cst_17 = arith.constant 5.000000e-01 : f32
    %137 = vector.broadcast %cst_17 : f32 to vector<8x128xf32>
    %138 = arith.mulf %137, %136 : vector<8x128xf32>
    %139 = math.tanh %138 : vector<8x128xf32>
    %cst_18 = arith.constant 5.000000e-01 : f32
    %140 = vector.broadcast %cst_18 : f32 to vector<8x128xf32>
    %141 = arith.mulf %140, %139 : vector<8x128xf32>
    %cst_19 = arith.constant 5.000000e-01 : f32
    %142 = vector.broadcast %cst_19 : f32 to vector<8x128xf32>
    %143 = arith.addf %141, %142 : vector<8x128xf32>
    %144 = arith.mulf %101, %5 : vector<8x128xf32>
    %145 = arith.addf %65, %144 : vector<8x128xf32>
    %146 = arith.mulf %103, %17 : vector<8x128xf32>
    %147 = arith.addf %145, %146 : vector<8x128xf32>
    %148 = arith.mulf %105, %29 : vector<8x128xf32>
    %149 = arith.addf %147, %148 : vector<8x128xf32>
    %150 = arith.mulf %107, %41 : vector<8x128xf32>
    %151 = arith.addf %149, %150 : vector<8x128xf32>
    %152 = arith.mulf %109, %53 : vector<8x128xf32>
    %153 = arith.addf %151, %152 : vector<8x128xf32>
    %cst_20 = arith.constant 5.000000e-01 : f32
    %154 = vector.broadcast %cst_20 : f32 to vector<8x128xf32>
    %155 = arith.mulf %154, %153 : vector<8x128xf32>
    %156 = math.tanh %155 : vector<8x128xf32>
    %cst_21 = arith.constant 5.000000e-01 : f32
    %157 = vector.broadcast %cst_21 : f32 to vector<8x128xf32>
    %158 = arith.mulf %157, %156 : vector<8x128xf32>
    %cst_22 = arith.constant 5.000000e-01 : f32
    %159 = vector.broadcast %cst_22 : f32 to vector<8x128xf32>
    %160 = arith.addf %158, %159 : vector<8x128xf32>
    %161 = arith.mulf %101, %7 : vector<8x128xf32>
    %162 = arith.addf %67, %161 : vector<8x128xf32>
    %163 = arith.mulf %103, %19 : vector<8x128xf32>
    %164 = arith.addf %162, %163 : vector<8x128xf32>
    %165 = arith.mulf %105, %31 : vector<8x128xf32>
    %166 = arith.addf %164, %165 : vector<8x128xf32>
    %167 = arith.mulf %107, %43 : vector<8x128xf32>
    %168 = arith.addf %166, %167 : vector<8x128xf32>
    %169 = arith.mulf %109, %55 : vector<8x128xf32>
    %170 = arith.addf %168, %169 : vector<8x128xf32>
    %cst_23 = arith.constant 5.000000e-01 : f32
    %171 = vector.broadcast %cst_23 : f32 to vector<8x128xf32>
    %172 = arith.mulf %171, %170 : vector<8x128xf32>
    %173 = math.tanh %172 : vector<8x128xf32>
    %cst_24 = arith.constant 5.000000e-01 : f32
    %174 = vector.broadcast %cst_24 : f32 to vector<8x128xf32>
    %175 = arith.mulf %174, %173 : vector<8x128xf32>
    %cst_25 = arith.constant 5.000000e-01 : f32
    %176 = vector.broadcast %cst_25 : f32 to vector<8x128xf32>
    %177 = arith.addf %175, %176 : vector<8x128xf32>
    %178 = arith.mulf %101, %9 : vector<8x128xf32>
    %179 = arith.addf %69, %178 : vector<8x128xf32>
    %180 = arith.mulf %103, %21 : vector<8x128xf32>
    %181 = arith.addf %179, %180 : vector<8x128xf32>
    %182 = arith.mulf %105, %33 : vector<8x128xf32>
    %183 = arith.addf %181, %182 : vector<8x128xf32>
    %184 = arith.mulf %107, %45 : vector<8x128xf32>
    %185 = arith.addf %183, %184 : vector<8x128xf32>
    %186 = arith.mulf %109, %57 : vector<8x128xf32>
    %187 = arith.addf %185, %186 : vector<8x128xf32>
    %cst_26 = arith.constant 5.000000e-01 : f32
    %188 = vector.broadcast %cst_26 : f32 to vector<8x128xf32>
    %189 = arith.mulf %188, %187 : vector<8x128xf32>
    %190 = math.tanh %189 : vector<8x128xf32>
    %cst_27 = arith.constant 5.000000e-01 : f32
    %191 = vector.broadcast %cst_27 : f32 to vector<8x128xf32>
    %192 = arith.mulf %191, %190 : vector<8x128xf32>
    %cst_28 = arith.constant 5.000000e-01 : f32
    %193 = vector.broadcast %cst_28 : f32 to vector<8x128xf32>
    %194 = arith.addf %192, %193 : vector<8x128xf32>
    %195 = arith.mulf %101, %11 : vector<8x128xf32>
    %196 = arith.addf %71, %195 : vector<8x128xf32>
    %197 = arith.mulf %103, %23 : vector<8x128xf32>
    %198 = arith.addf %196, %197 : vector<8x128xf32>
    %199 = arith.mulf %105, %35 : vector<8x128xf32>
    %200 = arith.addf %198, %199 : vector<8x128xf32>
    %201 = arith.mulf %107, %47 : vector<8x128xf32>
    %202 = arith.addf %200, %201 : vector<8x128xf32>
    %203 = arith.mulf %109, %59 : vector<8x128xf32>
    %204 = arith.addf %202, %203 : vector<8x128xf32>
    %cst_29 = arith.constant 5.000000e-01 : f32
    %205 = vector.broadcast %cst_29 : f32 to vector<8x128xf32>
    %206 = arith.mulf %205, %204 : vector<8x128xf32>
    %207 = math.tanh %206 : vector<8x128xf32>
    %cst_30 = arith.constant 5.000000e-01 : f32
    %208 = vector.broadcast %cst_30 : f32 to vector<8x128xf32>
    %209 = arith.mulf %208, %207 : vector<8x128xf32>
    %cst_31 = arith.constant 5.000000e-01 : f32
    %210 = vector.broadcast %cst_31 : f32 to vector<8x128xf32>
    %211 = arith.addf %209, %210 : vector<8x128xf32>
    %212 = arith.mulf %126, %73 : vector<8x128xf32>
    %213 = arith.addf %97, %212 : vector<8x128xf32>
    %214 = arith.mulf %143, %77 : vector<8x128xf32>
    %215 = arith.addf %213, %214 : vector<8x128xf32>
    %216 = arith.mulf %160, %81 : vector<8x128xf32>
    %217 = arith.addf %215, %216 : vector<8x128xf32>
    %218 = arith.mulf %177, %85 : vector<8x128xf32>
    %219 = arith.addf %217, %218 : vector<8x128xf32>
    %220 = arith.mulf %194, %89 : vector<8x128xf32>
    %221 = arith.addf %219, %220 : vector<8x128xf32>
    %222 = arith.mulf %211, %93 : vector<8x128xf32>
    %223 = arith.addf %221, %222 : vector<8x128xf32>
    %224 = math.tanh %223 : vector<8x128xf32>
    %c0_32 = arith.constant 0 : index
    %c0_33 = arith.constant 0 : index
    %c0_34 = arith.constant 0 : index
    %225 = vector.load %arg3[%c0_32, %c0_33, %c0_34] : memref<2x8x128xf32, #tpu.memory_space<vmem>>, vector<1x8x128xf32>
    %226 = vector.shape_cast %225 : vector<1x8x128xf32> to vector<8x128xf32>
    %227 = vector.shape_cast %224 : vector<8x128xf32> to vector<1x8x128xf32>
    tpu.vector_store %arg3[%c0_32, %c0_33, %c0_34], %227 {strides = array<i32>} : memref<2x8x128xf32, #tpu.memory_space<vmem>>, vector<1x8x128xf32>,
    %228 = arith.mulf %126, %75 : vector<8x128xf32>
    %229 = arith.addf %99, %228 : vector<8x128xf32>
    %230 = arith.mulf %143, %79 : vector<8x128xf32>
    %231 = arith.addf %229, %230 : vector<8x128xf32>
    %232 = arith.mulf %160, %83 : vector<8x128xf32>
    %233 = arith.addf %231, %232 : vector<8x128xf32>
    %234 = arith.mulf %177, %87 : vector<8x128xf32>
    %235 = arith.addf %233, %234 : vector<8x128xf32>
    %236 = arith.mulf %194, %91 : vector<8x128xf32>
    %237 = arith.addf %235, %236 : vector<8x128xf32>
    %238 = arith.mulf %211, %95 : vector<8x128xf32>
    %239 = arith.addf %237, %238 : vector<8x128xf32>
    %240 = math.tanh %239 : vector<8x128xf32>
    %c1_35 = arith.constant 1 : index
    %c0_36 = arith.constant 0 : index
    %c0_37 = arith.constant 0 : index
    %241 = vector.load %arg3[%c1_35, %c0_36, %c0_37] : memref<2x8x128xf32, #tpu.memory_space<vmem>>, vector<1x8x128xf32>
    %242 = vector.shape_cast %241 : vector<1x8x128xf32> to vector<8x128xf32>
    %243 = vector.shape_cast %240 : vector<8x128xf32> to vector<1x8x128xf32>
    tpu.vector_store %arg3[%c1_35, %c0_36, %c0_37], %243 {strides = array<i32>} : memref<2x8x128xf32, #tpu.memory_space<vmem>>, vector<1x8x128xf32>,
    return
  }
  func.func @transform_0(%arg0: i32) -> i32 {
    %c0_i32 = arith.constant 0 : i32
    %c0_i32_0 = arith.constant 0 : i32
    return %c0_i32 : i32
  }
  func.func @transform_1(%arg0: i32) -> (i32, i32, i32) {
    %c0_i32 = arith.constant 0 : i32
    %c0_i32_0 = arith.constant 0 : i32
    %c0_i32_1 = arith.constant 0 : i32
    return %c0_i32, %c0_i32_0, %arg0 : i32, i32, i32
  }
  func.func @transform_2(%arg0: i32) -> (i32, i32, i32) {
    %c0_i32 = arith.constant 0 : i32
    %c0_i32_0 = arith.constant 0 : i32
    %c0_i32_1 = arith.constant 0 : i32
    return %c0_i32, %c0_i32_0, %arg0 : i32, i32, i32
  }
}

</mosaic_0001>

<llo_original>
// kernel: controller_forward.1
$region0: #{controller_forward.1}
  #allocation0 [shape = 'u32[]', space=smem, size = 0x4, offset = 0x4, fixed_abs, tag = 'smem constant byte address 0x4 - core index']
  #allocation1 [shape = 'u32[144,128]{1,0:T(1,128)}', space=vmem, size = 0x12000, scoped, tag = 'internal scratch']
  %s0 = inlined_call_operand.vmem [shape: f32[50], index: 0, kind: input, shape index: {}]
  %s1 = inlined_call_operand.vmem [shape: f32[5,8,128], index: 1, kind: input, shape index: {}]
  %s2 = inlined_call_operand.vmem [shape: f32[2,8,128], index: 2, kind: output, shape index: {}]
  %s3 = sld [smem:[#allocation0]]
  $region22: #{controller_forward.1} parent=0
    _
  %s5 = ssub.s32 1, %s3
  %s6 = scalar_select 0, %s5, %s3
  $region1: #{controller_forward.1} parent=0
    #allocation2 [shape = 'u8[512]{0}', space=smem, size = 0x200, scoped, tag = 'input window, operand 0, single buffered']
    #allocation3 [shape = 's32[1]{0}', space=sflag, size = 0x4, scoped, tag = 'scoped memory for controller_forward.1']
    %7 = vsyncpa [#allocation3], 0
    // Predicated region
    $region2: #{controller_forward.1} parent=1 // pred_check
      _
    $region3: #{controller_forward.1} parent=1 // pred_check_branch
      %9 = sbr.rel (0) target = $region5
    $region4: #{controller_forward.1} parent=1 // pred_region
      %s11 = ssub.s32 16, 16
      %12 = vsyncadd [#allocation3], %s11
      %s14 = sshll.u32 %s0, 4
      %s15 = int_to_ptr.vmem [resolvable:$true] %s14
      %17 = dma.vmem_to_smem %s15, 16, [#allocation2], [#allocation3]
    $region5: #{controller_forward.1} parent=1 // pred_fallthru
      _
    // Predicated region
    $region6: #{controller_forward.1} parent=1 // pred_check
      _
    $region7: #{controller_forward.1} parent=1 // pred_check_branch
      %19 = sbr.rel (0) target = $region9
    $region8: #{controller_forward.1} parent=1 // pred_region
      _
    $region9: #{controller_forward.1} parent=1 // pred_fallthru
      _
    // Predicated region
    $region10: #{controller_forward.1} parent=1 // pred_check
      _
    $region11: #{controller_forward.1} parent=1 // pred_check_branch
      %21 = sbr.rel (0) target = $region13
    $region12: #{controller_forward.1} parent=1 // pred_region
      %22 = dma.done [#allocation3], 16
    $region13: #{controller_forward.1} parent=1 // pred_fallthru
      _
    %23 = sfence
    %s24 = sld [smem:[#allocation2]]
    %v25 = vstv %s24
    %s26 = sld [smem:[#allocation2 + $0x1]]
    %v27 = vstv %s26
    %s28 = sld [smem:[#allocation2 + $0x2]]
    %v29 = vstv %s28
    %s30 = sld [smem:[#allocation2 + $0x3]]
    %v31 = vstv %s30
    %s32 = sld [smem:[#allocation2 + $0x4]]
    %v33 = vstv %s32
    %s34 = sld [smem:[#allocation2 + $0x5]]
    %v35 = vstv %s34
    %s36 = sld [smem:[#allocation2 + $0x6]]
    %v37 = vstv %s36
    %s38 = sld [smem:[#allocation2 + $0x7]]
    %v39 = vstv %s38
    %s40 = sld [smem:[#allocation2 + $0x8]]
    %v41 = vstv %s40
    %s42 = sld [smem:[#allocation2 + $0x9]]
    %v43 = vstv %s42
    %s44 = sld [smem:[#allocation2 + $0xa]]
    %v45 = vstv %s44
    %s46 = sld [smem:[#allocation2 + $0xb]]
    %v47 = vstv %s46
    %s48 = sld [smem:[#allocation2 + $0xc]]
    %v49 = vstv %s48
    %s50 = sld [smem:[#allocation2 + $0xd]]
    %v51 = vstv %s50
    %s52 = sld [smem:[#allocation2 + $0xe]]
    %v53 = vstv %s52
    %s54 = sld [smem:[#allocation2 + $0xf]]
    %v55 = vstv %s54
    %s56 = sld [smem:[#allocation2 + $0x10]]
    %v57 = vstv %s56
    %s58 = sld [smem:[#allocation2 + $0x11]]
    %v59 = vstv %s58
    %s60 = sld [smem:[#allocation2 + $0x12]]
    %v61 = vstv %s60
    %s62 = sld [smem:[#allocation2 + $0x13]]
    %v63 = vstv %s62
    %s64 = sld [smem:[#allocation2 + $0x14]]
    %v65 = vstv %s64
    %s66 = sld [smem:[#allocation2 + $0x15]]
    %v67 = vstv %s66
    %s68 = sld [smem:[#allocation2 + $0x16]]
    %v69 = vstv %s68
    %s70 = sld [smem:[#allocation2 + $0x17]]
    %v71 = vstv %s70
    %s72 = sld [smem:[#allocation2 + $0x18]]
    %v73 = vstv %s72
    %s74 = sld [smem:[#allocation2 + $0x19]]
    %v75 = vstv %s74
    %s76 = sld [smem:[#allocation2 + $0x1a]]
    %v77 = vstv %s76
    %s78 = sld [smem:[#allocation2 + $0x1b]]
    %v79 = vstv %s78
    %s80 = sld [smem:[#allocation2 + $0x1c]]
    %v81 = vstv %s80
    %s82 = sld [smem:[#allocation2 + $0x1d]]
    %v83 = vstv %s82
    %s84 = sld [smem:[#allocation2 + $0x1e]]
    %v85 = vstv %s84
    %s86 = sld [smem:[#allocation2 + $0x1f]]
    %v87 = vstv %s86
    %s88 = sld [smem:[#allocation2 + $0x20]]
    %v89 = vstv %s88
    %s90 = sld [smem:[#allocation2 + $0x21]]
    %v91 = vstv %s90
    %s92 = sld [smem:[#allocation2 + $0x22]]
    %v93 = vstv %s92
    %s94 = sld [smem:[#allocation2 + $0x23]]
    %v95 = vstv %s94
    %s96 = sld [smem:[#allocation2 + $0x24]]
    %v97 = vstv %s96
    %s98 = sld [smem:[#allocation2 + $0x25]]
    %v99 = vstv %s98
    %s100 = sld [smem:[#allocation2 + $0x26]]
    %v101 = vstv %s100
    %s102 = sld [smem:[#allocation2 + $0x27]]
    %v103 = vstv %s102
    %s104 = sld [smem:[#allocation2 + $0x28]]
    %v105 = vstv %s104
    %s106 = sld [smem:[#allocation2 + $0x29]]
    %v107 = vstv %s106
    %s108 = sld [smem:[#allocation2 + $0x2a]]
    %v109 = vstv %s108
    %s110 = sld [smem:[#allocation2 + $0x2b]]
    %v111 = vstv %s110
    %s112 = sld [smem:[#allocation2 + $0x2c]]
    %v113 = vstv %s112
    %s114 = sld [smem:[#allocation2 + $0x2d]]
    %v115 = vstv %s114
    %s116 = sld [smem:[#allocation2 + $0x2e]]
    %v117 = vstv %s116
    %s118 = sld [smem:[#allocation2 + $0x2f]]
    %v119 = vstv %s118
    %s120 = sld [smem:[#allocation2 + $0x30]]
    %v121 = vstv %s120
    %s122 = sld [smem:[#allocation2 + $0x31]]
    %v123 = vstv %s122
    %v124 = vld [vmem:[%s1] sm:$0xff]
    %s125 = scalar_lea.vmem %s1, 8
    %v126 = vld [vmem:[%s125] sm:$0xff]
    %s127 = scalar_lea.vmem %s1, 16
    %v128 = vld [vmem:[%s127] sm:$0xff]
    %s129 = scalar_lea.vmem %s1, 24
    %v130 = vld [vmem:[%s129] sm:$0xff]
    %s131 = scalar_lea.vmem %s1, 32
    %v132 = vld [vmem:[%s131] sm:$0xff]
    %v133 = vmul.f32 %v124, %v25
    %v134 = vadd.f32 %v85, %v133
    %v135 = vmul.f32 %v126, %v37
    %v136 = vadd.f32 %v134, %v135
    %v137 = vmul.f32 %v128, %v49
    %v138 = vadd.f32 %v136, %v137
    %v139 = vmul.f32 %v130, %v61
    %v140 = vadd.f32 %v138, %v139
    %v141 = vmul.f32 %v132, %v73
    %v142 = vadd.f32 %v140, %v141
    %v143 = vmul.f32 %v142, 0.5
    %v144 = vtanh.pop %v143
    %v145 = vmul.f32 %v144, 0.5
    %v146 = vadd.f32 %v145, 0.5
    %v147 = vmul.f32 %v124, %v27
    %v148 = vadd.f32 %v87, %v147
    %v149 = vmul.f32 %v126, %v39
    %v150 = vadd.f32 %v148, %v149
    %v151 = vmul.f32 %v128, %v51
    %v152 = vadd.f32 %v150, %v151
    %v153 = vmul.f32 %v130, %v63
    %v154 = vadd.f32 %v152, %v153
    %v155 = vmul.f32 %v132, %v75
    %v156 = vadd.f32 %v154, %v155
    %v157 = vmul.f32 %v156, 0.5
    %v158 = vtanh.pop %v157
    %v159 = vmul.f32 %v158, 0.5
    %v160 = vadd.f32 %v159, 0.5
    %v161 = vmul.f32 %v124, %v29
    %v162 = vadd.f32 %v89, %v161
    %v163 = vmul.f32 %v126, %v41
    %v164 = vadd.f32 %v162, %v163
    %v165 = vmul.f32 %v128, %v53
    %v166 = vadd.f32 %v164, %v165
    %v167 = vmul.f32 %v130, %v65
    %v168 = vadd.f32 %v166, %v167
    %v169 = vmul.f32 %v132, %v77
    %v170 = vadd.f32 %v168, %v169
    %v171 = vmul.f32 %v170, 0.5
    %v172 = vtanh.pop %v171
    %v173 = vmul.f32 %v172, 0.5
    %v174 = vadd.f32 %v173, 0.5
    %v175 = vmul.f32 %v124, %v31
    %v176 = vadd.f32 %v91, %v175
    %v177 = vmul.f32 %v126, %v43
    %v178 = vadd.f32 %v176, %v177
    %v179 = vmul.f32 %v128, %v55
    %v180 = vadd.f32 %v178, %v179
    %v181 = vmul.f32 %v130, %v67
    %v182 = vadd.f32 %v180, %v181
    %v183 = vmul.f32 %v132, %v79
    %v184 = vadd.f32 %v182, %v183
    %v185 = vmul.f32 %v184, 0.5
    %v186 = vtanh.pop %v185
    %v187 = vmul.f32 %v186, 0.5
    %v188 = vadd.f32 %v187, 0.5
    %v189 = vmul.f32 %v124, %v33
    %v190 = vadd.f32 %v93, %v189
    %v191 = vmul.f32 %v126, %v45
    %v192 = vadd.f32 %v190, %v191
    %v193 = vmul.f32 %v128, %v57
    %v194 = vadd.f32 %v192, %v193
    %v195 = vmul.f32 %v130, %v69
    %v196 = vadd.f32 %v194, %v195
    %v197 = vmul.f32 %v132, %v81
    %v198 = vadd.f32 %v196, %v197
    %v199 = vmul.f32 %v198, 0.5
    %v200 = vtanh.pop %v199
    %v201 = vmul.f32 %v200, 0.5
    %v202 = vadd.f32 %v201, 0.5
    %v203 = vmul.f32 %v124, %v35
    %v204 = vadd.f32 %v95, %v203
    %v205 = vmul.f32 %v126, %v47
    %v206 = vadd.f32 %v204, %v205
    %v207 = vmul.f32 %v128, %v59
    %v208 = vadd.f32 %v206, %v207
    %v209 = vmul.f32 %v130, %v71
    %v210 = vadd.f32 %v208, %v209
    %v211 = vmul.f32 %v132, %v83
    %v212 = vadd.f32 %v210, %v211
    %v213 = vmul.f32 %v212, 0.5
    %v214 = vtanh.pop %v213
    %v215 = vmul.f32 %v214, 0.5
    %v216 = vadd.f32 %v215, 0.5
    %v217 = vmul.f32 %v146, %v97
    %v218 = vadd.f32 %v121, %v217
    %v219 = vmul.f32 %v160, %v101
    %v220 = vadd.f32 %v218, %v219
    %v221 = vmul.f32 %v174, %v105
    %v222 = vadd.f32 %v220, %v221
    %v223 = vmul.f32 %v188, %v109
    %v224 = vadd.f32 %v222, %v223
    %v225 = vmul.f32 %v202, %v113
    %v226 = vadd.f32 %v224, %v225
    %v227 = vmul.f32 %v216, %v117
    %v228 = vadd.f32 %v226, %v227
    %v229 = vtanh.pop %v228
    %230 = vst [vmem:[%s2] sm:$0xff] %v229
    %v231 = vmul.f32 %v146, %v99
    %v232 = vadd.f32 %v123, %v231
    %v233 = vmul.f32 %v160, %v103
    %v234 = vadd.f32 %v232, %v233
    %v235 = vmul.f32 %v174, %v107
    %v236 = vadd.f32 %v234, %v235
    %v237 = vmul.f32 %v188, %v111
    %v238 = vadd.f32 %v236, %v237
    %v239 = vmul.f32 %v202, %v115
    %v240 = vadd.f32 %v238, %v239
    %v241 = vmul.f32 %v216, %v119
    %v242 = vadd.f32 %v240, %v241
    %v243 = vtanh.pop %v242
    %s244 = scalar_lea.vmem %s2, 8
    %245 = vst [vmem:[%s244] sm:$0xff] %v243
    // Predicated region
    $region14: #{controller_forward.1} parent=1 // pred_check
      _
    $region15: #{controller_forward.1} parent=1 // pred_check_branch
      %247 = sbr.rel (0) target = $region17
    $region16: #{controller_forward.1} parent=1 // pred_region
      _
    $region17: #{controller_forward.1} parent=1 // pred_fallthru
      _
    // Predicated region
    $region18: #{controller_forward.1} parent=1 // pred_check
      _
    $region19: #{controller_forward.1} parent=1 // pred_check_branch
      %249 = sbr.rel (0) target = $region21
    $region20: #{controller_forward.1} parent=1 // pred_region
      _
    $region21: #{controller_forward.1} parent=1 // pred_fallthru
      _
    %250 = vsyncpa [#allocation3], 1

</llo_original>
